<compile_context>
chip_gen: v5e
topology: v5e:2x2
jax: 0.10.0
libtpu: 0.0.40
codegen_flags: <defaults>
</compile_context>

<pallas_src>
import functools

import jax
import jax.numpy as jnp
from jax.experimental import pallas as pl
from jax.experimental.pallas import tpu as pltpu


def _fusion_kernel(*refs, c_half: int, apply_dropout: bool):
    if apply_dropout:
        dec_ref, back_ref, cat_ref, mask_ref, out_ref = refs
    else:
        dec_ref, back_ref, cat_ref, out_ref = refs
        mask_ref = None

    # decoder split done on the VMEM block (static sublane slices).
    first = dec_ref[:c_half, :].astype(jnp.float32)
    last = dec_ref[c_half:, :].astype(jnp.float32)

    gate = jax.nn.sigmoid(first)                       # EUP exp + VPU
    fused = gate * back_ref[...].astype(jnp.float32) + last * (1.0 - gate)

    if apply_dropout:
        # training-mode Dropout(p=0.5): keep w.p. 0.5, scale kept values by 2.
        fused = fused * (mask_ref[...].astype(jnp.float32) * 2.0)

    # fused channels, then the concatenated channels -- concat fused in-kernel.
    out_ref[:c_half, :] = fused.astype(out_ref.dtype)
    out_ref[c_half:, :] = cat_ref[...].astype(out_ref.dtype)


def _pick_hw_tile(hw, ch_total, itemsize, vmem_budget_bytes=4 * 1024 * 1024):
    """Largest lane-dense (multiple-of-128) tile of H*W within the VMEM budget."""
    if hw % 128 != 0:
        # TODO(synk): non-multiple-of-128 spatial sizes fall back to a full-HW
        # block (correct, but stores are lane-masked).
        return hw
    per_col = ch_total * itemsize * 2          # all blocks, double-buffered
    max_tile = max(128, (vmem_budget_bytes // per_col) // 128 * 128)
    tile = min(hw, max_tile)
    while hw % tile:
        tile -= 128
    return tile


def fusion_block_forward(features_back, features_decoder, features_concat,
                         *, dropout_key=None, training=True):
    """JAX/Pallas equivalent of FusionBlock.forward (hardstretch=False)."""
    n, c_dec, h, w = features_decoder.shape
    c_half = c_dec // 2
    assert features_back.shape == (n, c_half, h, w)
    nc, c_cat, hc, wc = features_concat.shape
    assert (nc, hc, wc) == (n, h, w)

    c_out = c_half + c_cat
    hw = h * w
    dtype = features_back.dtype
    itemsize = jnp.dtype(dtype).itemsize

    # Contiguous reshapes to (N, C, H*W) -- no HBM copies, lane axis = H*W.
    dec = features_decoder.reshape(n, c_dec, hw)
    back = features_back.reshape(n, c_half, hw)
    cat = features_concat.reshape(n, c_cat, hw)

    ch_total = c_dec + c_half + c_cat + c_out + (c_half if training else 0)
    hw_tile = _pick_hw_tile(hw, ch_total, itemsize)
    grid = (n, hw // hw_tile)

    def spec(c):
        # leading batch dim squeezed out of the kernel refs.
        return pl.BlockSpec((None, c, hw_tile), lambda b, t: (b, 0, t))

    inputs = [dec, back, cat]
    in_specs = [spec(c_dec), spec(c_half), spec(c_cat)]
    if training:
        if dropout_key is None:
            dropout_key = jax.random.PRNGKey(0)
        keep = jax.random.bernoulli(dropout_key, 0.5, (n, c_half, hw))
        inputs.append(keep.astype(dtype))
        in_specs.append(spec(c_half))

    elems = n * c_half * hw
    bytes_accessed = itemsize * (dec.size + back.size + cat.size
                                 + (elems if training else 0) + n * c_out * hw)

    kernel = functools.partial(_fusion_kernel, c_half=c_half,
                               apply_dropout=training)

    out = pl.pallas_call(
        kernel,
        out_shape=jax.ShapeDtypeStruct((n, c_out, hw), dtype),
        grid=grid,
        in_specs=in_specs,
        out_specs=spec(c_out),
        compiler_params=pltpu.CompilerParams(
            dimension_semantics=("parallel", "parallel")),
        cost_estimate=pl.CostEstimate(
            flops=int(6 * elems),
            transcendentals=int(elems),
            bytes_accessed=int(bytes_accessed)),
    )(*inputs)

    return out.reshape(n, c_out, h, w)


if __name__ == "__main__":
    key = jax.random.PRNGKey(0)
    k1, k2, k3, kdrop = jax.random.split(key, 4)

    N, C_BACK, H, W = 2, 4, 16, 16
    C_DEC = 2 * C_BACK          # decoder split in half -> halves match back
    C_CONCAT = 4

    features_back = jax.random.normal(k1, (N, C_BACK, H, W), dtype=jnp.float32)
    features_decoder = jax.random.normal(k2, (N, C_DEC, H, W), dtype=jnp.float32)
    features_concat = jax.random.normal(k3, (N, C_CONCAT, H, W), dtype=jnp.float32)

    # training mode (dropout applied)
    out_train = fusion_block_forward(features_back, features_decoder,
                                     features_concat, dropout_key=kdrop,
                                     training=True)
    out_train = jax.block_until_ready(out_train)
    assert out_train.shape == (N, C_BACK + C_CONCAT, H, W)

    # pure-JAX reference
    gate = jax.nn.sigmoid(features_decoder[:, :C_BACK])
    fused_ref = gate * features_back + features_decoder[:, C_BACK:] * (1.0 - gate)

    keep_ref = jax.random.bernoulli(kdrop, 0.5, (N, C_BACK, H * W)) \
        .reshape(N, C_BACK, H, W)
    ref_train_fused = jnp.where(keep_ref, 2.0 * fused_ref, 0.0)
    assert jnp.allclose(out_train[:, :C_BACK], ref_train_fused, atol=1e-5), \
        "training-mode fused channels mismatch"
    assert jnp.array_equal(out_train[:, C_BACK:], features_concat), \
        "concatenated channels mismatch"

    # eval mode (no dropout)
    out_eval = fusion_block_forward(features_back, features_decoder,
                                    features_concat, training=False)
    out_eval = jax.block_until_ready(out_eval)
    ref_eval = jnp.concatenate([fused_ref, features_concat], axis=1)
    assert jnp.allclose(out_eval, ref_eval, atol=1e-5), "eval-mode mismatch"

    print("KERNEL_OK")
</pallas_src>

<mosaic_0001>
module attributes {stable_mosaic.version = 11 : i64} {
  func.func @_fusion_kernel(%arg0: i32, %arg1: i32, %arg2: memref<1x8x256xf32, #tpu.memory_space<vmem>>, %arg3: memref<1x4x256xf32, #tpu.memory_space<vmem>>, %arg4: memref<1x4x256xf32, #tpu.memory_space<vmem>>, %arg5: memref<1x4x256xf32, #tpu.memory_space<vmem>>, %arg6: memref<1x8x256xf32, #tpu.memory_space<vmem>>) attributes {dimension_semantics = [#tpu.dimension_semantics<parallel>, #tpu.dimension_semantics<parallel>], iteration_bounds = array<i64: 2, 1>, scalar_prefetch = 0 : i64, scratch_operands = 0 : i64, tpu.core_type = #tpu.core_type<tc>, window_params = [{transform_indices = @transform_0, window_bounds = array<i64: 1, 8, 256>}, {transform_indices = @transform_1, window_bounds = array<i64: 1, 4, 256>}, {transform_indices = @transform_2, window_bounds = array<i64: 1, 4, 256>}, {transform_indices = @transform_3, window_bounds = array<i64: 1, 4, 256>}, {transform_indices = @transform_4, window_bounds = array<i64: 1, 8, 256>}]} {
    %c0 = arith.constant 0 : index
    %c0_0 = arith.constant 0 : index
    %c0_1 = arith.constant 0 : index
    %0 = vector.load %arg2[%c0, %c0_0, %c0_1] : memref<1x8x256xf32, #tpu.memory_space<vmem>>, vector<1x4x256xf32>
    %1 = vector.shape_cast %0 : vector<1x4x256xf32> to vector<4x256xf32>
    %c0_2 = arith.constant 0 : index
    %c4 = arith.constant 4 : index
    %c0_3 = arith.constant 0 : index
    %2 = vector.load %arg2[%c0_2, %c4, %c0_3] : memref<1x8x256xf32, #tpu.memory_space<vmem>>, vector<1x4x256xf32>
    %3 = vector.shape_cast %2 : vector<1x4x256xf32> to vector<4x256xf32>
    %4 = arith.negf %1 : vector<4x256xf32>
    %5 = math.exp %4 : vector<4x256xf32>
    %cst = arith.constant 1.000000e+00 : f32
    %6 = vector.broadcast %cst : f32 to vector<4x256xf32>
    %7 = arith.addf %6, %5 : vector<4x256xf32>
    %8 = arith.divf %6, %7 : vector<4x256xf32>
    %c0_4 = arith.constant 0 : index
    %c0_5 = arith.constant 0 : index
    %c0_6 = arith.constant 0 : index
    %9 = vector.load %arg3[%c0_4, %c0_5, %c0_6] : memref<1x4x256xf32, #tpu.memory_space<vmem>>, vector<1x4x256xf32>
    %10 = vector.shape_cast %9 : vector<1x4x256xf32> to vector<4x256xf32>
    %11 = arith.mulf %8, %10 : vector<4x256xf32>
    %cst_7 = arith.constant 1.000000e+00 : f32
    %12 = vector.broadcast %cst_7 : f32 to vector<4x256xf32>
    %13 = arith.subf %12, %8 : vector<4x256xf32>
    %14 = arith.mulf %3, %13 : vector<4x256xf32>
    %15 = arith.addf %11, %14 : vector<4x256xf32>
    %c0_8 = arith.constant 0 : index
    %c0_9 = arith.constant 0 : index
    %c0_10 = arith.constant 0 : index
    %16 = vector.load %arg5[%c0_8, %c0_9, %c0_10] : memref<1x4x256xf32, #tpu.memory_space<vmem>>, vector<1x4x256xf32>
    %17 = vector.shape_cast %16 : vector<1x4x256xf32> to vector<4x256xf32>
    %cst_11 = arith.constant 2.000000e+00 : f32
    %18 = vector.broadcast %cst_11 : f32 to vector<4x256xf32>
    %19 = arith.mulf %17, %18 : vector<4x256xf32>
    %20 = arith.mulf %15, %19 : vector<4x256xf32>
    %c0_12 = arith.constant 0 : index
    %c0_13 = arith.constant 0 : index
    %c0_14 = arith.constant 0 : index
    %21 = vector.load %arg6[%c0_12, %c0_13, %c0_14] : memref<1x8x256xf32, #tpu.memory_space<vmem>>, vector<1x4x256xf32>
    %22 = vector.shape_cast %21 : vector<1x4x256xf32> to vector<4x256xf32>
    %23 = vector.shape_cast %20 : vector<4x256xf32> to vector<1x4x256xf32>
    tpu.vector_store %arg6[%c0_12, %c0_13, %c0_14], %23 {strides = array<i32>} : memref<1x8x256xf32, #tpu.memory_space<vmem>>, vector<1x4x256xf32>,
    %c0_15 = arith.constant 0 : index
    %c0_16 = arith.constant 0 : index
    %c0_17 = arith.constant 0 : index
    %24 = vector.load %arg4[%c0_15, %c0_16, %c0_17] : memref<1x4x256xf32, #tpu.memory_space<vmem>>, vector<1x4x256xf32>
    %25 = vector.shape_cast %24 : vector<1x4x256xf32> to vector<4x256xf32>
    %c0_18 = arith.constant 0 : index
    %c4_19 = arith.constant 4 : index
    %c0_20 = arith.constant 0 : index
    %26 = vector.load %arg6[%c0_18, %c4_19, %c0_20] : memref<1x8x256xf32, #tpu.memory_space<vmem>>, vector<1x4x256xf32>
    %27 = vector.shape_cast %26 : vector<1x4x256xf32> to vector<4x256xf32>
    %28 = vector.shape_cast %25 : vector<4x256xf32> to vector<1x4x256xf32>
    tpu.vector_store %arg6[%c0_18, %c4_19, %c0_20], %28 {strides = array<i32>} : memref<1x8x256xf32, #tpu.memory_space<vmem>>, vector<1x4x256xf32>,
    return
  }
  func.func @transform_0(%arg0: i32, %arg1: i32) -> (i32, i32, i32) {
    %c0_i32 = arith.constant 0 : i32
    %c0_i32_0 = arith.constant 0 : i32
    return %arg0, %c0_i32, %arg1 : i32, i32, i32
  }
  func.func @transform_1(%arg0: i32, %arg1: i32) -> (i32, i32, i32) {
    %c0_i32 = arith.constant 0 : i32
    %c0_i32_0 = arith.constant 0 : i32
    return %arg0, %c0_i32, %arg1 : i32, i32, i32
  }
  func.func @transform_2(%arg0: i32, %arg1: i32) -> (i32, i32, i32) {
    %c0_i32 = arith.constant 0 : i32
    %c0_i32_0 = arith.constant 0 : i32
    return %arg0, %c0_i32, %arg1 : i32, i32, i32
  }
  func.func @transform_3(%arg0: i32, %arg1: i32) -> (i32, i32, i32) {
    %c0_i32 = arith.constant 0 : i32
    %c0_i32_0 = arith.constant 0 : i32
    return %arg0, %c0_i32, %arg1 : i32, i32, i32
  }
  func.func @transform_4(%arg0: i32, %arg1: i32) -> (i32, i32, i32) {
    %c0_i32 = arith.constant 0 : i32
    %c0_i32_0 = arith.constant 0 : i32
    return %arg0, %c0_i32, %arg1 : i32, i32, i32
  }
}

</mosaic_0001>

<llo_original>
// kernel: tpu_custom_call.1
$region0: #{tpu_custom_call.1}
  #allocation0 [shape = 'u32[]', space=smem, size = 0x4, offset = 0x4, fixed_abs, tag = 'smem constant byte address 0x4 - core index']
  #allocation1 [shape = 'u32[72,128]{1,0:T(1,128)}', space=vmem, size = 0x9000, scoped, tag = 'internal scratch']
  %s0 = inlined_call_operand.hbm [shape: f32[2,8,256], index: 0, kind: input, shape index: {}]
  %s1 = inlined_call_operand.hbm [shape: f32[2,4,256], index: 1, kind: input, shape index: {}]
  %s2 = inlined_call_operand.hbm [shape: f32[2,4,256], index: 2, kind: input, shape index: {}]
  %s3 = inlined_call_operand.hbm [shape: f32[2,4,256], index: 3, kind: input, shape index: {}]
  %s4 = inlined_call_operand.hbm [shape: f32[2,8,256], index: 4, kind: output, shape index: {}]
  %s5 = sld [smem:[#allocation0]]
  $region65: #{tpu_custom_call.1} parent=0
    _
  %s7 = ssub.s32 1, %s5
  %s8 = scalar_select 0, %s7, %s5
  $region1: #{tpu_custom_call.1} parent=0
    #allocation2 [shape = 'u8[16384]{0}', space=vmem, size = 0x4000, scoped, tag = 'input window, operand 0']
    #allocation3 [shape = 's32[2]{0}', space=sflag, size = 0x8, scoped, tag = 'scoped memory for tpu_custom_call.1']
    #allocation4 [shape = 's32[2]{0}', space=sflag, size = 0x8, scoped, tag = 'scoped memory for tpu_custom_call.1']
    #allocation5 [shape = 'u8[8192]{0}', space=vmem, size = 0x2000, scoped, tag = 'input window, operand 1']
    #allocation6 [shape = 's32[2]{0}', space=sflag, size = 0x8, scoped, tag = 'scoped memory for tpu_custom_call.1']
    #allocation7 [shape = 'u8[8192]{0}', space=vmem, size = 0x2000, scoped, tag = 'input window, operand 2']
    #allocation8 [shape = 'u8[8192]{0}', space=vmem, size = 0x2000, scoped, tag = 'input window, operand 3']
    #allocation9 [shape = 's32[2]{0}', space=sflag, size = 0x8, scoped, tag = 'scoped memory for tpu_custom_call.1']
    #allocation10 [shape = 'u8[16384]{0}', space=vmem, size = 0x4000, scoped, tag = 'output window, operand 0']
    %9 = vsyncpa [#allocation3], 0
    %s10 = scalar_lea.sflag [#allocation3], 1
    %11 = vsyncpa %s10, 0
    %12 = vsyncpa [#allocation6], 0
    %s13 = scalar_lea.sflag [#allocation6], 1
    %14 = vsyncpa %s13, 0
    %15 = vsyncpa [#allocation9], 0
    %s16 = scalar_lea.sflag [#allocation9], 1
    %17 = vsyncpa %s16, 0
    %18 = vsyncpa [#allocation4], 0
    %s19 = scalar_lea.sflag [#allocation4], 1
    %20 = vsyncpa %s19, 0
    loop: start=0, step=1, limit=4
    $region2: #{tpu_custom_call.1} parent=1 // loop_pre_header
      _
    $region3: #{tpu_custom_call.1} parent=1 // loop_header
      %s22 = sphi 0, %s26
      %p23 = scmp.ge.s32.totalorder %s22, 4
      %s29 = sphi 0, %s41
      %s30 = sphi 0, %s37
      %s31 = sphi 0, %s29
      %s32 = sphi 0, %s30
      %s33 = sphi 0, %s31
      %s34 = sphi 0, %s32
      %s46 = sphi 0, %s48
      %s49 = sphi 0, %s46
      %s50 = sphi 0, %s49
      %s66 = sphi 0, %s50
      %s74 = sphi 0, %s76
      %s77 = sphi 0, %s74
      %s78 = sphi 0, %s77
      %s94 = sphi 0, %s78
      %s102 = sphi 0, %s104
      %s105 = sphi 0, %s102
      %s106 = sphi 0, %s105
      %s122 = sphi 0, %s106
      %s130 = sphi 0, %s132
      %s133 = sphi 0, %s130
      %s134 = sphi 0, %s133
      %s150 = sphi 0, %s134
      %s158 = sphi 0, %s160
      %s161 = sphi 0, %s158
      %s162 = sphi 0, %s161
      %s178 = sphi 0, %s162
    $region4: #{tpu_custom_call.1} parent=1 // loop_header_branch
      %25 = sbr.rel (%p23) target = $region8
    $region5: #{tpu_custom_call.1} parent=1 // loop_body
      %s27 = ssub.s32 %s22, 1
      %s28 = ssub.s32 %s22, 2
      %s35 = sadd.s32 1, %s30
      %p36 = scmp.ge.s32.totalorder %s35, 1
      %s37 = scalar_select %p36, 0, %s35
      %s38 = sadd.s32 1, %s29
      %s39 = scalar_select %p36, %s38, %s29
      %p40 = scmp.ge.s32.totalorder %s39, 2
      %s41 = scalar_select %p40, 0, %s39
      %s42 = ssub.s32 %s29, %s41
      %s43 = ssub.s32 %s30, %s37
      %s44 = sor.u32 %s42, %s43
      %p45 = scmp.eq.s32.totalorder %s44, 0
      %s47 = sadd.s32 %s46, 1
      %s48 = scalar_select %p45, %s46, %s47
      %p51 = pneg %p45
      %p52 = scmp.eq.s32.totalorder %s22, 1
      %p53 = por %p51, %p52
      %p54 = scmp.ne.s32.totalorder %s46, %s49
      %p55 = scmp.eq.s32.totalorder %s22, 0
      %p56 = por %p54, %p55
      %p57 = scmp.ne.s32.totalorder %s46, %s49
      %p58 = scmp.eq.s32.totalorder %s27, 1
      %p59 = por %p57, %p58
      %p60 = scmp.ne.s32.totalorder %s49, %s50
      %p61 = scmp.eq.s32.totalorder %s27, 0
      %p62 = por %p60, %p61
      %p63 = scmp.ne.s32.totalorder %s49, %s50
      %p64 = scmp.eq.s32.totalorder %s28, 1
      %p65 = por %p63, %p64
      %p67 = scmp.ne.s32.totalorder %s50, %s66
      %p68 = scmp.eq.s32.totalorder %s28, 0
      %p69 = por %p67, %p68
      %s70 = ssub.s32 %s29, %s41
      %s71 = ssub.s32 %s30, %s37
      %s72 = sor.u32 %s70, %s71
      %p73 = scmp.eq.s32.totalorder %s72, 0
      %s75 = sadd.s32 %s74, 1
      %s76 = scalar_select %p73, %s74, %s75
      %p79 = pneg %p73
      %p80 = scmp.eq.s32.totalorder %s22, 1
      %p81 = por %p79, %p80
      %p82 = scmp.ne.s32.totalorder %s74, %s77
      %p83 = scmp.eq.s32.totalorder %s22, 0
      %p84 = por %p82, %p83
      %p85 = scmp.ne.s32.totalorder %s74, %s77
      %p86 = scmp.eq.s32.totalorder %s27, 1
      %p87 = por %p85, %p86
      %p88 = scmp.ne.s32.totalorder %s77, %s78
      %p89 = scmp.eq.s32.totalorder %s27, 0
      %p90 = por %p88, %p89
      %p91 = scmp.ne.s32.totalorder %s77, %s78
      %p92 = scmp.eq.s32.totalorder %s28, 1
      %p93 = por %p91, %p92
      %p95 = scmp.ne.s32.totalorder %s78, %s94
      %p96 = scmp.eq.s32.totalorder %s28, 0
      %p97 = por %p95, %p96
      %s98 = ssub.s32 %s29, %s41
      %s99 = ssub.s32 %s30, %s37
      %s100 = sor.u32 %s98, %s99
      %p101 = scmp.eq.s32.totalorder %s100, 0
      %s103 = sadd.s32 %s102, 1
      %s104 = scalar_select %p101, %s102, %s103
      %p107 = pneg %p101
      %p108 = scmp.eq.s32.totalorder %s22, 1
      %p109 = por %p107, %p108
      %p110 = scmp.ne.s32.totalorder %s102, %s105
      %p111 = scmp.eq.s32.totalorder %s22, 0
      %p112 = por %p110, %p111
      %p113 = scmp.ne.s32.totalorder %s102, %s105
      %p114 = scmp.eq.s32.totalorder %s27, 1
      %p115 = por %p113, %p114
      %p116 = scmp.ne.s32.totalorder %s105, %s106
      %p117 = scmp.eq.s32.totalorder %s27, 0
      %p118 = por %p116, %p117
      %p119 = scmp.ne.s32.totalorder %s105, %s106
      %p120 = scmp.eq.s32.totalorder %s28, 1
      %p121 = por %p119, %p120
      %p123 = scmp.ne.s32.totalorder %s106, %s122
      %p124 = scmp.eq.s32.totalorder %s28, 0
      %p125 = por %p123, %p124
      %s126 = ssub.s32 %s29, %s41
      %s127 = ssub.s32 %s30, %s37
      %s128 = sor.u32 %s126, %s127
      %p129 = scmp.eq.s32.totalorder %s128, 0
      %s131 = sadd.s32 %s130, 1
      %s132 = scalar_select %p129, %s130, %s131
      %p135 = pneg %p129
      %p136 = scmp.eq.s32.totalorder %s22, 1
      %p137 = por %p135, %p136
      %p138 = scmp.ne.s32.totalorder %s130, %s133
      %p139 = scmp.eq.s32.totalorder %s22, 0
      %p140 = por %p138, %p139
      %p141 = scmp.ne.s32.totalorder %s130, %s133
      %p142 = scmp.eq.s32.totalorder %s27, 1
      %p143 = por %p141, %p142
      %p144 = scmp.ne.s32.totalorder %s133, %s134
      %p145 = scmp.eq.s32.totalorder %s27, 0
      %p146 = por %p144, %p145
      %p147 = scmp.ne.s32.totalorder %s133, %s134
      %p148 = scmp.eq.s32.totalorder %s28, 1
      %p149 = por %p147, %p148
      %p151 = scmp.ne.s32.totalorder %s134, %s150
      %p152 = scmp.eq.s32.totalorder %s28, 0
      %p153 = por %p151, %p152
      %s154 = ssub.s32 %s29, %s41
      %s155 = ssub.s32 %s30, %s37
      %s156 = sor.u32 %s154, %s155
      %p157 = scmp.eq.s32.totalorder %s156, 0
      %s159 = sadd.s32 %s158, 1
      %s160 = scalar_select %p157, %s158, %s159
      %p163 = pneg %p157
      %p164 = scmp.eq.s32.totalorder %s22, 1
      %p165 = por %p163, %p164
      %p166 = scmp.ne.s32.totalorder %s158, %s161
      %p167 = scmp.eq.s32.totalorder %s22, 0
      %p168 = por %p166, %p167
      %p169 = scmp.ne.s32.totalorder %s158, %s161
      %p170 = scmp.eq.s32.totalorder %s27, 1
      %p171 = por %p169, %p170
      %p172 = scmp.ne.s32.totalorder %s161, %s162
      %p173 = scmp.eq.s32.totalorder %s27, 0
      %p174 = por %p172, %p173
      %p175 = scmp.ne.s32.totalorder %s161, %s162
      %p176 = scmp.eq.s32.totalorder %s28, 1
      %p177 = por %p175, %p176
      %p179 = scmp.ne.s32.totalorder %s162, %s178
      %p180 = scmp.eq.s32.totalorder %s28, 0
      %p181 = por %p179, %p180
      %p182 = scmp.le.s32.totalorder 1, %s22
      %p183 = scmp.lt.s32.totalorder %s22, 3
      %p184 = pnand %p182, %p183
      %p185 = pneg %p184
      // Predicated region
      $region9: #{tpu_custom_call.1} parent=5 // pred_check
        _
      $region10: #{tpu_custom_call.1} parent=5 // pred_check_branch
        %187 = sbr.rel (%p184) target = $region12
      $region11: #{tpu_custom_call.1} parent=5 // pred_region
        %s188 = ssub.s32 %s22, 1
      $region12: #{tpu_custom_call.1} parent=5 // pred_fallthru
        _
      %p189 = scmp.lt.s32.totalorder %s22, 2
      // Predicated region
      $region13: #{tpu_custom_call.1} parent=5 // pred_check
        %p190 = pneg %p189
      $region14: #{tpu_custom_call.1} parent=5 // pred_check_branch
        %192 = sbr.rel (%p190) target = $region16
      $region15: #{tpu_custom_call.1} parent=5 // pred_region
        // Predicated region
        $region17: #{tpu_custom_call.1} parent=15 // pred_check
          %p193 = pneg %p56
        $region18: #{tpu_custom_call.1} parent=15 // pred_check_branch
          %195 = sbr.rel (%p193) target = $region20
        $region19: #{tpu_custom_call.1} parent=15 // pred_region
          %s196 = sand.u32 %s46, 1
          %s197 = scalar_lea.sflag [#allocation3], %s196
          %s198 = sand.u32 %s46, 1
          %s199 = smul.addr %s198, 16
          %s200 = scalar_lea.vmem [#allocation2], %s199
          %s201 = smul.u32 2, %s30
          %203 = vsyncadd %s197, 0
          %s204 = smul.addr %s29, 2
          %s205 = sadd.s32 %s201, %s204
          %s206 = smul.addr %s205, 8
          %s207 = scalar_lea.hbm %s0, %s206
          %s209 = sshll.u32 %s207, 4
          %s210 = int_to_ptr.hbm [resolvable:$true] %s209
          %s211 = sshll.u32 %s200, 4
          %s212 = int_to_ptr.vmem [resolvable:$true] %s211
          %214 = dma.hbm_to_vmem [thread:$0]  %s210, 256, %s212, %s197
        $region20: #{tpu_custom_call.1} parent=15 // pred_fallthru
          _
        // Predicated region
        $region21: #{tpu_custom_call.1} parent=15 // pred_check
          %p215 = pneg %p84
        $region22: #{tpu_custom_call.1} parent=15 // pred_check_branch
          %217 = sbr.rel (%p215) target = $region24
        $region23: #{tpu_custom_call.1} parent=15 // pred_region
          %s218 = sand.u32 %s22, 1
          %s219 = scalar_lea.sflag [#allocation6], %s218
          %s220 = sand.u32 %s74, 1
          %s221 = smul.addr %s220, 8
          %s222 = scalar_lea.vmem [#allocation5], %s221
          %s223 = smul.u32 2, %s30
          %225 = vsyncadd %s219, 0
          %s226 = smul.addr %s29, 2
          %s227 = sadd.s32 %s223, %s226
          %s228 = smul.addr %s227, 4
          %s229 = scalar_lea.hbm %s1, %s228
          %s231 = sshll.u32 %s229, 4
          %s232 = int_to_ptr.hbm [resolvable:$true] %s231
          %s233 = sshll.u32 %s222, 4
          %s234 = int_to_ptr.vmem [resolvable:$true] %s233
          %236 = dma.hbm_to_vmem [thread:$0]  %s232, 128, %s234, %s219
        $region24: #{tpu_custom_call.1} parent=15 // pred_fallthru
          _
        // Predicated region
        $region25: #{tpu_custom_call.1} parent=15 // pred_check
          %p237 = pneg %p112
        $region26: #{tpu_custom_call.1} parent=15 // pred_check_branch
          %239 = sbr.rel (%p237) target = $region28
        $region27: #{tpu_custom_call.1} parent=15 // pred_region
          %s240 = sand.u32 %s22, 1
          %s241 = scalar_lea.sflag [#allocation6], %s240
          %s242 = sand.u32 %s102, 1
          %s243 = smul.addr %s242, 8
          %s244 = scalar_lea.vmem [#allocation7], %s243
          %s245 = smul.u32 2, %s30
          %247 = vsyncadd %s241, 0
          %s248 = smul.addr %s29, 2
          %s249 = sadd.s32 %s245, %s248
          %s250 = smul.addr %s249, 4
          %s251 = scalar_lea.hbm %s2, %s250
          %s253 = sshll.u32 %s251, 4
          %s254 = int_to_ptr.hbm [resolvable:$true] %s253
          %s255 = sshll.u32 %s244, 4
          %s256 = int_to_ptr.vmem [resolvable:$true] %s255
          %258 = dma.hbm_to_vmem [thread:$0]  %s254, 128, %s256, %s241
        $region28: #{tpu_custom_call.1} parent=15 // pred_fallthru
          _
        // Predicated region
        $region29: #{tpu_custom_call.1} parent=15 // pred_check
          %p259 = pneg %p140
        $region30: #{tpu_custom_call.1} parent=15 // pred_check_branch
          %261 = sbr.rel (%p259) target = $region32
        $region31: #{tpu_custom_call.1} parent=15 // pred_region
          %s262 = sand.u32 %s130, 1
          %s263 = scalar_lea.sflag [#allocation9], %s262
          %s264 = sand.u32 %s130, 1
          %s265 = smul.addr %s264, 8
          %s266 = scalar_lea.vmem [#allocation8], %s265
          %s267 = smul.u32 2, %s30
          %269 = vsyncadd %s263, 0
          %s270 = smul.addr %s29, 2
          %s271 = sadd.s32 %s267, %s270
          %s272 = smul.addr %s271, 4
          %s273 = scalar_lea.hbm %s3, %s272
          %s275 = sshll.u32 %s273, 4
          %s276 = int_to_ptr.hbm [resolvable:$true] %s275
          %s277 = sshll.u32 %s266, 4
          %s278 = int_to_ptr.vmem [resolvable:$true] %s277
          %280 = dma.hbm_to_vmem [thread:$0]  %s276, 128, %s278, %s263
        $region32: #{tpu_custom_call.1} parent=15 // pred_fallthru
          _
      $region16: #{tpu_custom_call.1} parent=5 // pred_fallthru
        _
      %p281 = scmp.le.s32.totalorder 1, %s22
      %p282 = scmp.lt.s32.totalorder %s22, 3
      %p283 = pnand %p281, %p282
      %p284 = pneg %p283
      // Predicated region
      $region33: #{tpu_custom_call.1} parent=5 // pred_check
        _
      $region34: #{tpu_custom_call.1} parent=5 // pred_check_branch
        %286 = sbr.rel (%p283) target = $region36
      $region35: #{tpu_custom_call.1} parent=5 // pred_region
        %s287 = ssub.s32 %s22, 1
        %s288 = sand.u32 %s49, 1
        %s289 = scalar_lea.sflag [#allocation3], %s288
        %s290 = sand.u32 %s49, 1
        %s291 = smul.addr %s290, 16
        %s292 = scalar_lea.vmem [#allocation2], %s291
        // Predicated region
        $region37: #{tpu_custom_call.1} parent=35 // pred_check
          %p293 = pneg %p62
        $region38: #{tpu_custom_call.1} parent=35 // pred_check_branch
          %295 = sbr.rel (%p293) target = $region40
        $region39: #{tpu_custom_call.1} parent=35 // pred_region
          %297 = dma.done %s289, 256
        $region40: #{tpu_custom_call.1} parent=35 // pred_fallthru
          _
        %s298 = sand.u32 %s27, 1
        %s299 = scalar_lea.sflag [#allocation6], %s298
        %s300 = sand.u32 %s77, 1
        %s301 = smul.addr %s300, 8
        %s302 = scalar_lea.vmem [#allocation5], %s301
        // Predicated region
        $region41: #{tpu_custom_call.1} parent=35 // pred_check
          %p303 = pneg %p90
        $region42: #{tpu_custom_call.1} parent=35 // pred_check_branch
          %305 = sbr.rel (%p303) target = $region44
        $region43: #{tpu_custom_call.1} parent=35 // pred_region
          %307 = dma.done %s299, 128
        $region44: #{tpu_custom_call.1} parent=35 // pred_fallthru
          _
        %s308 = sand.u32 %s27, 1
        %s309 = scalar_lea.sflag [#allocation6], %s308
        %s310 = sand.u32 %s105, 1
        %s311 = smul.addr %s310, 8
        %s312 = scalar_lea.vmem [#allocation7], %s311
        // Predicated region
        $region45: #{tpu_custom_call.1} parent=35 // pred_check
          %p313 = pneg %p118
        $region46: #{tpu_custom_call.1} parent=35 // pred_check_branch
          %315 = sbr.rel (%p313) target = $region48
        $region47: #{tpu_custom_call.1} parent=35 // pred_region
          %317 = dma.done %s309, 128
        $region48: #{tpu_custom_call.1} parent=35 // pred_fallthru
          _
        %s318 = sand.u32 %s133, 1
        %s319 = scalar_lea.sflag [#allocation9], %s318
        %s320 = sand.u32 %s133, 1
        %s321 = smul.addr %s320, 8
        %s322 = scalar_lea.vmem [#allocation8], %s321
        // Predicated region
        $region49: #{tpu_custom_call.1} parent=35 // pred_check
          %p323 = pneg %p146
        $region50: #{tpu_custom_call.1} parent=35 // pred_check_branch
          %325 = sbr.rel (%p323) target = $region52
        $region51: #{tpu_custom_call.1} parent=35 // pred_region
          %327 = dma.done %s319, 128
        $region52: #{tpu_custom_call.1} parent=35 // pred_fallthru
          _
        %s328 = sand.u32 %s49, 1
        %s329 = scalar_lea.sflag [#allocation3], %s328
        %s330 = sand.u32 %s49, 1
        %s331 = smul.addr %s330, 16
        %s332 = scalar_lea.vmem [#allocation2], %s331
        %p333 = pneg %p62
        %p334 = pneg %p59
        %s335 = sand.u32 %s27, 1
        %s336 = scalar_lea.sflag [#allocation6], %s335
        %s337 = sand.u32 %s77, 1
        %s338 = smul.addr %s337, 8
        %s339 = scalar_lea.vmem [#allocation5], %s338
        %p340 = pneg %p90
        %p341 = pneg %p87
        %s342 = sand.u32 %s27, 1
        %s343 = scalar_lea.sflag [#allocation6], %s342
        %s344 = sand.u32 %s105, 1
        %s345 = smul.addr %s344, 8
        %s346 = scalar_lea.vmem [#allocation7], %s345
        %p347 = pneg %p118
        %p348 = pneg %p115
        %s349 = sand.u32 %s133, 1
        %s350 = scalar_lea.sflag [#allocation9], %s349
        %s351 = sand.u32 %s133, 1
        %s352 = smul.addr %s351, 8
        %s353 = scalar_lea.vmem [#allocation8], %s352
        %p354 = pneg %p146
        %p355 = pneg %p143
        %p356 = pneg %p174
        %p357 = pneg %p171
        %s358 = sand.u32 %s161, 1
        %s359 = scalar_lea.sflag [#allocation4], %s358
        %s360 = sand.u32 %s161, 1
        %s361 = smul.addr %s360, 16
        %s362 = scalar_lea.vmem [#allocation10], %s361
        %s363 = smul.u32 2, %s32
        %s364 = smul.u32 2, %s32
        %s365 = smul.u32 2, %s32
        %s366 = smul.u32 2, %s32
        %s367 = smul.u32 2, %s32
        %v368 = vld [vmem:[%s292] sm:$0xf]
        %v369 = vld [vmem:[%s292 + $0x8] sm:$0xf]
        %v370 = vld [vmem:[%s292] sm:$0xf0]
        %v371 = vld [vmem:[%s292 + $0x8] sm:$0xf0]
        %v372 = vxor.u32 %v368, 2147483648
        %v373 = vxor.u32 %v369, 2147483648
        %v374 = vmul.f32 %v372, 1.442695
        %v375 = vpow.pop %v374
        %v376 = vmul.f32 %v373, 1.442695
        %v377 = vpow.pop %v376
        %v378 = vadd.f32 %v375, 1.0
        %v379 = vadd.f32 %v377, 1.0
        %v380 = vrcp.pop %v378
        %v381 = vmul.f32 %v378, %v380
        %v382 = vsub.f32 1.0, %v381
        %v383 = vmul.f32 %v380, %v382
        %v384 = vadd.f32 %v380, %v383
        %vm385 = vweird.f32 %v378
        %vm386 = vweird.f32 %v380
        %vm387 = vmor %vm385, %vm386
        %v388 = vsel %vm387, %v380, %v384
        %v389 = vand.u32 2147483647, %v378
        %vm390 = vcmp.eq.f32.partialorder %v389, 8.507059e+37
        %v391 = vand.u32 %v378, 2147483648
        %v392 = vor.u32 1.1754944e-38, %v391
        %v393 = vsel %vm390, %v392, %v388
        %v394 = vmul.f32 1.0, %v393
        %v395 = vrcp.pop %v379
        %v396 = vmul.f32 %v379, %v395
        %v397 = vsub.f32 1.0, %v396
        %v398 = vmul.f32 %v395, %v397
        %v399 = vadd.f32 %v395, %v398
        %vm400 = vweird.f32 %v379
        %vm401 = vweird.f32 %v395
        %vm402 = vmor %vm400, %vm401
        %v403 = vsel %vm402, %v395, %v399
        %v404 = vand.u32 2147483647, %v379
        %vm405 = vcmp.eq.f32.partialorder %v404, 8.507059e+37
        %v406 = vand.u32 %v379, 2147483648
        %v407 = vor.u32 1.1754944e-38, %v406
        %v408 = vsel %vm405, %v407, %v403
        %v409 = vmul.f32 1.0, %v408
        %v410 = vld [vmem:[%s302] sm:$0xff]
        %412 = vst [vmem:[#allocation1] ss:$2 sm:$0xff] %v410
        %v413 = vld.sshfl [vmem:[#allocation1] sm:$0xff pattern:$0x75316420]
        %v414 = vld.sshfl [vmem:[#allocation1 + $0x8] sm:$0xff pattern:$0x75316420]
        %v417 = vmul.f32 %v394, %v413
        %v418 = vmul.f32 %v409, %v414
        %v419 = vsub.f32 1.0, %v394
        %v420 = vsub.f32 1.0, %v409
        %v423 = vrot.slane %v419, 4
        %v424 = vrot.slane %v420, 4
        %v427 = vmul.f32 %v370, %v423
        %v428 = vmul.f32 %v371, %v424
        %v431 = vrot.slane %v427, 4
        %v432 = vrot.slane %v428, 4
        %v435 = vadd.f32 %v417, %v431
        %v436 = vadd.f32 %v418, %v432
        %v437 = vld [vmem:[%s322] sm:$0xff]
        %v438 = vmul.f32 %v437, 2.0
        %440 = vst [vmem:[#allocation1] ss:$2 sm:$0xff] %v438
        %v441 = vld.sshfl [vmem:[#allocation1] sm:$0xff pattern:$0x75316420]
        %v442 = vld.sshfl [vmem:[#allocation1 + $0x8] sm:$0xff pattern:$0x75316420]
        %v445 = vmul.f32 %v435, %v441
        %v446 = vmul.f32 %v436, %v442
        %447 = vst [vmem:[%s362] sm:$0xf] %v445
        %448 = vst [vmem:[%s362 + $0x8] sm:$0xf] %v446
        %v449 = vld [vmem:[%s312] sm:$0xff]
        %s451 = scalar_lea.vmem [#allocation1], 1
        %452 = vst [vmem:[%s451] ss:$2 sm:$0xff] %v449
        %v453 = vld.sshfl [vmem:[#allocation1] sm:$0xff pattern:$0x75316420]
        %v454 = vld.sshfl [vmem:[#allocation1 + $0x8] sm:$0xff pattern:$0x75316420]
        %457 = vst [vmem:[%s362] sm:$0xf0] %v453
        %458 = vst [vmem:[%s362 + $0x8] sm:$0xf0] %v454
        %s459 = sand.u32 %s161, 1
        %s460 = scalar_lea.sflag [#allocation4], %s459
        %s461 = sand.u32 %s161, 1
        %s462 = smul.addr %s461, 16
        %s463 = scalar_lea.vmem [#allocation10], %s462
        // Predicated region
        $region53: #{tpu_custom_call.1} parent=35 // pred_check
          %p464 = pneg %p171
        $region54: #{tpu_custom_call.1} parent=35 // pred_check_branch
          %466 = sbr.rel (%p464) target = $region56
        $region55: #{tpu_custom_call.1} parent=35 // pred_region
          %s467 = smul.u32 2, %s32
          %469 = vsyncadd %s460, 0
          %s470 = smul.addr %s31, 2
          %s471 = sadd.s32 %s467, %s470
          %s472 = smul.addr %s471, 8
          %s473 = scalar_lea.hbm %s4, %s472
          %s475 = sshll.u32 %s463, 4
          %s476 = int_to_ptr.vmem [resolvable:$true] %s475
          %s477 = sshll.u32 %s473, 4
          %s478 = int_to_ptr.hbm [resolvable:$true] %s477
          %480 = dma.vmem_to_hbm [thread:$0]  %s476, 256, %s478, %s460
        $region56: #{tpu_custom_call.1} parent=35 // pred_fallthru
          _
      $region36: #{tpu_custom_call.1} parent=5 // pred_fallthru
        _
      %p481 = scmp.le.s32.totalorder 2, %s22
      // Predicated region
      $region57: #{tpu_custom_call.1} parent=5 // pred_check
        %p482 = pneg %p481
      $region58: #{tpu_custom_call.1} parent=5 // pred_check_branch
        %484 = sbr.rel (%p482) target = $region60
      $region59: #{tpu_custom_call.1} parent=5 // pred_region
        %s485 = ssub.s32 %s22, 2
        // Predicated region
        $region61: #{tpu_custom_call.1} parent=59 // pred_check
          %p486 = pneg %p177
        $region62: #{tpu_custom_call.1} parent=59 // pred_check_branch
          %488 = sbr.rel (%p486) target = $region64
        $region63: #{tpu_custom_call.1} parent=59 // pred_region
          %s489 = sand.u32 %s162, 1
          %s490 = scalar_lea.sflag [#allocation4], %s489
          %s491 = sand.u32 %s162, 1
          %s492 = smul.addr %s491, 16
          %s493 = scalar_lea.vmem [#allocation10], %s492
          %495 = dma.done %s490, 256
        $region64: #{tpu_custom_call.1} parent=59 // pred_fallthru
          _
      $region60: #{tpu_custom_call.1} parent=5 // pred_fallthru
        _
    $region6: #{tpu_custom_call.1} parent=1 // loop_footer
      %s26 = sadd.s32 1, %s22
    $region7: #{tpu_custom_call.1} parent=1 // loop_footer_branch
      %21 = sbr.rel target = $region3
    $region8: #{tpu_custom_call.1} parent=1 // loop_exit
      _
    %496 = vsyncpa [#allocation3], 1
    %s497 = scalar_lea.sflag [#allocation3], 1
    %498 = vsyncpa %s497, 1
    %499 = vsyncpa [#allocation6], 1
    %s500 = scalar_lea.sflag [#allocation6], 1
    %501 = vsyncpa %s500, 1
    %502 = vsyncpa [#allocation9], 1
    %s503 = scalar_lea.sflag [#allocation9], 1
    %504 = vsyncpa %s503, 1
    %505 = vsyncpa [#allocation4], 1
    %s506 = scalar_lea.sflag [#allocation4], 1
    %507 = vsyncpa %s506, 1

</llo_original>
